<compile_context>
chip_gen: v5e
topology: v5e:2x2
jax: 0.10.0
libtpu: 0.0.40
codegen_flags: <defaults>
</compile_context>

<pallas_src>
import jax
import jax.numpy as jnp
from jax.experimental import pallas as pl
from jax.experimental.pallas import tpu as pltpu

_MAX_LANE_COLS = 4096        # widest lane slab we will reshape to (multiple of 128)
_TILE_BYTES = 2 * 1024 * 1024  # ~2 MiB/tile -> double-buffered in+out ~= 8 MiB VMEM


# ----------------------------------------------------------------------------
# Kernels
# ----------------------------------------------------------------------------
def _dma_copy_kernel(x_hbm, o_hbm, sem):
    # Single direct HBM->HBM DMA of the whole array; no VMEM staging.
    cp = pltpu.make_async_copy(x_hbm, o_hbm, sem)
    cp.start()
    cp.wait()


def _tile_copy_kernel(x_ref, o_ref):
    # Pure pass-through of the current lane-dense VMEM tile.
    o_ref[...] = x_ref[...]


# ----------------------------------------------------------------------------
# Wrappers
# ----------------------------------------------------------------------------
def _identity_copy_dma(x):
    """Whole-array HBM->HBM async copy (no VMEM round trip, any shape)."""
    nbytes = x.size * x.dtype.itemsize
    return pl.pallas_call(
        _dma_copy_kernel,
        out_shape=jax.ShapeDtypeStruct(x.shape, x.dtype),
        in_specs=[pl.BlockSpec(memory_space=pl.ANY)],
        out_specs=pl.BlockSpec(memory_space=pl.ANY),
        scratch_shapes=[pltpu.SemaphoreType.DMA(())],
        cost_estimate=pl.CostEstimate(
            flops=0, transcendentals=0, bytes_accessed=2 * nbytes),
    )(x)


def _choose_lane_cols(total, max_cols=_MAX_LANE_COLS):
    """Largest multiple of 128 that divides `total` and is <= max_cols (0 if none)."""
    best = 0
    c = 128
    while c <= max_cols:
        if total % c == 0:
            best = c
        c += 128
    return best


def _identity_copy_tiled(x):
    """Lane-dense, pipelined VMEM copy; falls back to the DMA path when the
    element count is not a multiple of 128."""
    total = x.size
    cols = _choose_lane_cols(total)
    if cols == 0:
        # Non-128-divisible element count: the direct DMA path handles it
        # without masked partial stores or a whole-array VMEM block.
        return _identity_copy_dma(x)

    rows = total // cols
    x2d = x.reshape(rows, cols)  # layout plumbing only (lane-dense slab)

    bytes_per_row = cols * x.dtype.itemsize
    target_rows = max(1, _TILE_BYTES // bytes_per_row)
    if target_rows >= rows:
        block_rows = rows                      # full dim -> always legal
    else:
        block_rows = max(8, (target_rows // 8) * 8)  # sublane-aligned tile

    grid = (pl.cdiv(rows, block_rows),)
    nbytes = total * x.dtype.itemsize
    y2d = pl.pallas_call(
        _tile_copy_kernel,
        out_shape=jax.ShapeDtypeStruct((rows, cols), x.dtype),
        grid=grid,
        in_specs=[pl.BlockSpec((block_rows, cols), lambda i: (i, 0))],
        out_specs=pl.BlockSpec((block_rows, cols), lambda i: (i, 0)),
        compiler_params=pltpu.CompilerParams(
            dimension_semantics=("parallel",),
        ),
        cost_estimate=pl.CostEstimate(
            flops=0, transcendentals=0, bytes_accessed=2 * nbytes),
    )(x2d)
    return y2d.reshape(x.shape)


def parameter_module_forward(x, *, force_pallas_copy=False, method="dma"):
    """Pallas/JAX implementation of ParameterModule.forward (identity).

    Fast path: return `x` as-is (zero HBM traffic, zero launches).
    `force_pallas_copy=True` materializes a copy through Pallas:
      method="dma"   -> single HBM->HBM async DMA (default, closest to roofline)
      method="tiled" -> lane-dense pipelined VMEM copy (exercises BlockSpec path)
    """
    if not force_pallas_copy:
        # The forward is a no-op, so do nothing.
        return x
    if method == "tiled":
        return _identity_copy_tiled(x)
    return _identity_copy_dma(x)


class ParameterModuleJAX:
    """JAX mirror of ParameterModule: holds a lone parameter `val`,
    forward is identity (short-circuited; Pallas copy kernels available)."""

    def __init__(self, p):
        self.val = p  # registered but unused in forward (matches PyTorch)

    def __call__(self, x):
        return parameter_module_forward(x)


if __name__ == "__main__":
    key = jax.random.PRNGKey(0)
    k_p, k_x = jax.random.split(key)

    # Deterministic lone parameter (arbitrary shape; never used in forward).
    p = jax.random.normal(k_p, (32,), dtype=jnp.float32)

    # Small NCHW input consistent with a conv-style tensor.
    x = jax.random.normal(k_x, (2, 4, 16, 16), dtype=jnp.float32)

    mod = ParameterModuleJAX(p)

    # Fast path (what the module actually does): identity, no kernel.
    y_fast = mod(x)
    assert y_fast.shape == x.shape and y_fast.dtype == x.dtype

    # Forced copy #1: direct HBM->HBM DMA kernel.
    y_dma = parameter_module_forward(x, force_pallas_copy=True, method="dma")
    y_dma = jax.block_until_ready(y_dma)
    assert y_dma.shape == x.shape and y_dma.dtype == x.dtype
    assert bool(jnp.array_equal(y_dma, x))

    # Forced copy #2: lane-dense tiled pipeline kernel.
    y_tiled = parameter_module_forward(x, force_pallas_copy=True, method="tiled")
    y_tiled = jax.block_until_ready(y_tiled)
    assert y_tiled.shape == x.shape and y_tiled.dtype == x.dtype
    assert bool(jnp.array_equal(y_tiled, x))

    assert bool(jnp.array_equal(y_fast, x))
    print("KERNEL_OK")
</pallas_src>

<mosaic_0001>
module attributes {stable_mosaic.version = 11 : i64} {
  func.func @_dma_copy_kernel(%arg0: memref<2x4x16x16xf32, #tpu.memory_space<any>>, %arg1: memref<2x4x16x16xf32, #tpu.memory_space<any>>, %arg2: memref<!tpu.dma_semaphore, #tpu.memory_space<semaphore_mem>>) attributes {dimension_semantics = [], scalar_prefetch = 0 : i64, scratch_operands = 1 : i64, tpu.core_type = #tpu.core_type<tc>} {
    tpu.enqueue_dma source(%arg0 : memref<2x4x16x16xf32, #tpu.memory_space<any>>) target(%arg1 : memref<2x4x16x16xf32, #tpu.memory_space<any>>) target_semaphore(%arg2 : memref<!tpu.dma_semaphore, #tpu.memory_space<semaphore_mem>>)
    tpu.wait_dma2 semaphore(%arg2 : memref<!tpu.dma_semaphore, #tpu.memory_space<semaphore_mem>>) src(%arg0 : memref<2x4x16x16xf32, #tpu.memory_space<any>>) dst(%arg1 : memref<2x4x16x16xf32, #tpu.memory_space<any>>)
    return
  }
}

</mosaic_0001>

<llo_original>
// kernel: tpu_custom_call.1
$region0: #{tpu_custom_call.1}
  #allocation0 [shape = 'u32[]', space=smem, size = 0x4, offset = 0x4, fixed_abs, tag = 'smem constant byte address 0x4 - core index']
  #allocation1 [shape = 'u32[72,128]{1,0:T(1,128)}', space=vmem, size = 0x9000, scoped, tag = 'internal scratch']
  #allocation2 [shape = 's32[1]{0}', space=sflag, size = 0x4, scoped, tag = 'scratch operand']
  #allocation3 [shape = 's32[]', space=sflag, size = 0x4, offset = 0, fixed_abs, tag = 'sflag constant byte address 0x0 - dummy sync flag']
  #allocation4 [shape = 'u32[0]{0}', space=smem, size = 0, offset = 0, fixed_abs, tag = 'smem constant byte address 0x0 - null']
  %s0 = inlined_call_operand.hbm [shape: f32[2,4,16,16], index: 0, kind: input, shape index: {}]
  %s1 = inlined_call_operand.hbm [shape: f32[2,4,16,16], index: 1, kind: output, shape index: {}]
  %s2 = sld [smem:[#allocation0]]
  $region2: #{tpu_custom_call.1} parent=0
    _
  %s4 = ssub.s32 1, %s2
  %s5 = scalar_select 0, %s4, %s2
  %s7 = sshll.u32 1, 14
  %s8 = sxor.u32 4294967295, %s7
  %s10 = sshll.u32 %s0, 4
  %s11 = int_to_ptr.hbm [resolvable:$true] %s10
  %s12 = sshll.u32 %s1, 4
  %s13 = int_to_ptr.hbm [resolvable:$true] %s12
  %16 = dma.general %s11, 2048, %s13, [#allocation2], [#allocation3], [#allocation4], 0, 0
  %s17 = smul.u32 2, 4
  %s18 = smul.u32 %s17, 16
  %s19 = smul.u32 %s18, 1
  %s20 = sshll.u32 %s19, 4
  %21 = dma.done [#allocation2], %s20
  %22 = vsyncmov [#allocation2]
  %s23 = vpop.sfrf %22
  %p24 = scmp.eq.s32.totalorder %s23, 0
  %p25 = pneg %p24
  %27 = shalt.err (%p25)

</llo_original>
